<compile_context>
chip_gen: v6e
topology: v6e:2x2x1
jax: 0.10.0
libtpu: 0.0.40
codegen_flags: <defaults>
</compile_context>

<pallas_src>
import warnings

import jax
import jax.numpy as jnp
from jax.experimental import pallas as pl
from jax.experimental.pallas import tpu as pltpu


# ---------------------------------------------------------------------------
# Primary path: true no-op (zero HBM traffic).
# ---------------------------------------------------------------------------
def _noop_kernel(x_ref, o_ref):
    # Output aliases input, so no data movement is needed.  `touch` adds a
    # fake read+write dep on the aliased HBM buffer so the output is
    # considered produced by this kernel.
    del x_ref
    pltpu.touch(o_ref)


def temporal_maxpool(chirp_maps: jax.Array) -> jax.Array:
    """Pallas implementation of Temporalmaxpool.forward (identity)."""
    if chirp_maps.size == 0:
        return chirp_maps
    return pl.pallas_call(
        _noop_kernel,
        out_shape=jax.ShapeDtypeStruct(chirp_maps.shape, chirp_maps.dtype),
        in_specs=[pl.BlockSpec(memory_space=pl.ANY)],   # raw HBM ref, no DMA
        out_specs=pl.BlockSpec(memory_space=pl.ANY),    # raw HBM ref, no DMA
        input_output_aliases={0: 0},                    # output == input buffer
        compiler_params=pltpu.CompilerParams(has_side_effects=True),
    )(chirp_maps)


# ---------------------------------------------------------------------------
# Fallback path: aliased, lane-dense tiled copy (previously validated shape
# of kernel).  Only used if the no-op path fails to lower.
# ---------------------------------------------------------------------------
_LANE = 128
_MAX_LANE = 2048
# 2 MiB/block -> double-buffered (in + out) resident = 8 MiB, safely under the
# default scoped-VMEM limit on v5e (16 MiB) and v6e/v7x (32 MiB).
_BLOCK_BYTES_CAP = 2 * 1024 * 1024


def _copy_kernel(x_ref, o_ref):
    o_ref[...] = x_ref[...]


def _copy_layout(total, itemsize):
    """Pick a lane-dense (rows, lane) view and a row-tile size."""
    # Lane width: largest multiple of 128 (<= 2048) dividing `total`.
    lane = 0
    c = _MAX_LANE
    while c >= _LANE:
        if total % c == 0:
            lane = c
            break
        c -= _LANE
    if lane == 0:
        # No multiple-of-128 divisor: one wide contiguous row (full-extent
        # last dim is always a legal block dim; at most one masked tail vreg).
        return 1, total, 1

    rows = total // lane
    # Dtype-aware sublane rounding: (8,128) f32, (16,128) bf16, (32,128) int8.
    sub = max(8, 32 // itemsize)
    max_tile = max(sub, _BLOCK_BYTES_CAP // (lane * itemsize))
    tile = 0
    t = min(rows, max_tile)
    t -= t % sub
    while t >= sub:
        if rows % t == 0:
            tile = t
            break
        t -= sub
    if tile == 0:
        tile = rows  # full extent: legal for any row count (tiny shapes only)
    return rows, lane, tile


def _temporal_maxpool_copy(chirp_maps: jax.Array) -> jax.Array:
    """Safety-net identity: aliased, lane-dense, tiled HBM copy."""
    shape, dtype = chirp_maps.shape, chirp_maps.dtype
    total = chirp_maps.size
    if total == 0:
        return chirp_maps
    itemsize = jnp.dtype(dtype).itemsize
    rows, lane, tile = _copy_layout(total, itemsize)

    x2d = chirp_maps.reshape(rows, lane)  # metadata-only reshape
    out2d = pl.pallas_call(
        _copy_kernel,
        out_shape=jax.ShapeDtypeStruct((rows, lane), dtype),
        grid=(rows // tile,),
        in_specs=[pl.BlockSpec((tile, lane), lambda i: (i, 0))],
        out_specs=pl.BlockSpec((tile, lane), lambda i: (i, 0)),
        input_output_aliases={0: 0},
        compiler_params=pltpu.CompilerParams(
            dimension_semantics=("parallel",)),
        cost_estimate=pl.CostEstimate(
            flops=0, transcendentals=0, bytes_accessed=2 * total * itemsize),
    )(x2d)
    return out2d.reshape(shape)


if __name__ == "__main__":
    # Donation is the intended fast path; silence the harmless warning JAX
    # emits if a backend cannot consume a particular donated buffer.
    warnings.filterwarnings(
        "ignore", message="Some donated buffers were not usable"
    )

    key = jax.random.PRNGKey(0)
    # NCHW chirp-map tensor: batch=2, channels=4, 16x16 spatial.
    x = jax.random.normal(key, (2, 4, 16, 16), dtype=jnp.float32)

    # Keep reference values on host: x's device buffer is donated below.
    x_host = jax.device_get(x)

    try:
        fwd = jax.jit(temporal_maxpool, donate_argnums=0)
        y = jax.block_until_ready(fwd(x))
    except Exception:
        # Safety net: known-good aliased copy kernel (same semantics).
        fwd = jax.jit(_temporal_maxpool_copy, donate_argnums=0)
        y = jax.block_until_ready(fwd(jnp.asarray(x_host)))

    # Forward semantics: exact identity (same shape, dtype, values).
    assert y.shape == x_host.shape
    assert y.dtype == x_host.dtype
    assert bool(jnp.array_equal(y, jnp.asarray(x_host)))

    print("KERNEL_OK")
</pallas_src>

<mosaic_0001>
module attributes {stable_mosaic.version = 11 : i64} {
  func.func @_noop_kernel(%arg0: memref<2x4x16x16xf32, #tpu.memory_space<any>>, %arg1: memref<2x4x16x16xf32, #tpu.memory_space<any>>) attributes {dimension_semantics = [], scalar_prefetch = 0 : i64, scratch_operands = 0 : i64, tpu.core_type = #tpu.core_type<tc>} {
    return
  }
}

module attributes {stable_mosaic.version = 11 : i64} {
  func.func @_copy_kernel(%arg0: i32, %arg1: memref<1x2048xf32, #tpu.memory_space<vmem>>, %arg2: memref<1x2048xf32, #tpu.memory_space<vmem>>) attributes {dimension_semantics = [#tpu.dimension_semantics<parallel>], iteration_bounds = array<i64: 1>, scalar_prefetch = 0 : i64, scratch_operands = 0 : i64, tpu.core_type = #tpu.core_type<tc>, window_params = [{transform_indices = @transform_0, window_bounds = array<i64: 1, 2048>}, {transform_indices = @transform_1, window_bounds = array<i64: 1, 2048>}]} {
    %c0 = arith.constant 0 : index
    %c0_0 = arith.constant 0 : index
    %0 = vector.load %arg1[%c0, %c0_0] : memref<1x2048xf32, #tpu.memory_space<vmem>>, vector<1x2048xf32>
    %c0_1 = arith.constant 0 : index
    %c0_2 = arith.constant 0 : index
    %1 = vector.load %arg2[%c0_1, %c0_2] : memref<1x2048xf32, #tpu.memory_space<vmem>>, vector<1x2048xf32>
    tpu.vector_store %arg2[%c0_1, %c0_2], %0 {strides = array<i32>} : memref<1x2048xf32, #tpu.memory_space<vmem>>, vector<1x2048xf32>,
    return
  }
  func.func @transform_0(%arg0: i32) -> (i32, i32) {
    %c0_i32 = arith.constant 0 : i32
    %c0_i32_0 = arith.constant 0 : i32
    return %arg0, %c0_i32 : i32, i32
  }
  func.func @transform_1(%arg0: i32) -> (i32, i32) {
    %c0_i32 = arith.constant 0 : i32
    %c0_i32_0 = arith.constant 0 : i32
    return %arg0, %c0_i32 : i32, i32
  }
}

</mosaic_0001>

<llo_original>
// kernel: temporal_maxpool.1
$region0: #{temporal_maxpool.1}
  #allocation0 [shape = 'u32[]', space=smem, size = 0x4, offset = 0x4, fixed_abs, tag = 'smem constant byte address 0x4 - core index']
  #allocation1 [shape = 'u32[144,128]{1,0:T(1,128)}', space=vmem, size = 0x12000, scoped, tag = 'internal scratch']
  %s0 = inlined_call_operand.hbm [shape: f32[2,4,16,16], index: 0, kind: input, shape index: {}, may-alias: {0,1}]
  %s1 = inlined_call_operand.hbm [shape: f32[2,4,16,16], index: 1, kind: output, shape index: {}, may-alias: {0,1}]
  %s2 = sld [smem:[#allocation0]]
  $region2: #{temporal_maxpool.1} parent=0
    _
  %s4 = ssub.s32 1, %s2
  %s5 = scalar_select 0, %s4, %s2

// kernel: _temporal_maxpool_copy.1
$region0: #{_temporal_maxpool_copy.1}
  #allocation0 [shape = 'u32[]', space=smem, size = 0x4, offset = 0x4, fixed_abs, tag = 'smem constant byte address 0x4 - core index']
  #allocation1 [shape = 'u32[144,128]{1,0:T(1,128)}', space=vmem, size = 0x12000, scoped, tag = 'internal scratch']
  %s0 = inlined_call_operand.vmem [shape: f32[1,2048], index: 0, kind: input, shape index: {}, may-alias: {0,1}]
  %s1 = inlined_call_operand.vmem [shape: f32[1,2048], index: 1, kind: output, shape index: {}, may-alias: {0,1}]
  %s2 = sld [smem:[#allocation0]]
  $region14: #{_temporal_maxpool_copy.1} parent=0
    _
  %s4 = ssub.s32 1, %s2
  %s5 = scalar_select 0, %s4, %s2
  // Predicated region
  $region2: #{_temporal_maxpool_copy.1} parent=0 // pred_check
    _
  $region3: #{_temporal_maxpool_copy.1} parent=0 // pred_check_branch
    %7 = sbr.rel (0) target = $region5
  $region4: #{_temporal_maxpool_copy.1} parent=0 // pred_region
    _
  $region5: #{_temporal_maxpool_copy.1} parent=0 // pred_fallthru
    _
  %v8 = vld [vmem:[%s0] sm:$0xff]
  %v9 = vld [vmem:[%s0 + $0x8] sm:$0xff]
  %10 = vst [vmem:[%s1] sm:$0xff] %v8
  %11 = vst [vmem:[%s1 + $0x8] sm:$0xff] %v9
  // Predicated region
  $region6: #{_temporal_maxpool_copy.1} parent=0 // pred_check
    _
  $region7: #{_temporal_maxpool_copy.1} parent=0 // pred_check_branch
    %13 = sbr.rel (0) target = $region9
  $region8: #{_temporal_maxpool_copy.1} parent=0 // pred_region
    _
  $region9: #{_temporal_maxpool_copy.1} parent=0 // pred_fallthru
    _
  // Predicated region
  $region10: #{_temporal_maxpool_copy.1} parent=0 // pred_check
    _
  $region11: #{_temporal_maxpool_copy.1} parent=0 // pred_check_branch
    %15 = sbr.rel (0) target = $region13
  $region12: #{_temporal_maxpool_copy.1} parent=0 // pred_region
    _
  $region13: #{_temporal_maxpool_copy.1} parent=0 // pred_fallthru
    _

</llo_original>
